<compile_context>
chip_gen: v7x
topology: tpu7x:2x2x1
jax: 0.10.0
libtpu: 0.0.40
codegen_flags: <defaults>
</compile_context>

<pallas_src>
import jax
import jax.numpy as jnp
from jax.experimental import pallas as pl
from jax.experimental.pallas import tpu as pltpu


def _cat_emb_kernel(ids_ref, tab_ref, out_ref):
    # ids_ref: [tn, F]        int32  (per-feature codes, batch-major)
    # tab_ref: [F*E_pad, D]   float  (F tables padded to E_pad rows, concatenated)
    # out_ref: [tn, D]
    ids = ids_ref[...]                       # [tn, F]
    tab = tab_ref[...]                       # [EF, D]
    tn, num_feats = ids.shape
    ef = tab.shape[0]
    e_pad = ef // num_feats                  # static

    # Lane index over the concatenated vocabulary.
    lane = jax.lax.broadcasted_iota(jnp.int32, (tn, ef), 1)

    # Feature f occupies lanes [f*E_pad, (f+1)*E_pad); ranges are disjoint, so
    # an OR of the integer compares equals the multi-hot sum.  Small static F
    # -> unrolled VPU compares; a single cast right before the MXU.
    hit = ids[:, 0:1] == lane
    for f in range(1, num_feats):
        hit = jnp.logical_or(hit, (ids[:, f:f + 1] + f * e_pad) == lane)
    mh = hit.astype(tab.dtype)

    # Single MXU pass: multi-hot @ concatenated table == sum_f table_f[id_f].
    out_ref[...] = jnp.dot(mh, tab, preferred_element_type=jnp.float32
                           ).astype(out_ref.dtype)


def categorical_embedding(ids_nf: jax.Array, tables_cat: jax.Array, *,
                          block_n: int = 2048,
                          out_dtype=jnp.float32,
                          min_pallas_rows: int = 0) -> jax.Array:
    """ids_nf: [N, F] integer codes (column i in [0, num_emb_i)).
    tables_cat: [F*E_pad, D] float -- F tables zero-padded to E_pad rows and
    concatenated along rows.  Returns [N, D] in out_dtype.

    Set min_pallas_rows (~2048) in production to route tiny batches to a
    fused XLA gather instead of paying the pallas_call launch overhead."""
    N, F_ = ids_nf.shape
    EF, D = tables_cat.shape
    e_pad = EF // F_

    def cdiv(a, b):
        return (a + b - 1) // b

    def rup(a, m):
        return (a + m - 1) // m * m

    # Clamp into this feature's lane window so bad ids never alias into a
    # neighbouring table (ids in [num_emb_i, E_pad) still read zero rows).
    ids_nf = jnp.clip(ids_nf.astype(jnp.int32), 0, e_pad - 1)

    if N < min_pallas_rows:
        # Tiny batch: fused XLA gather-sum is cheaper than kernel launch.
        offs = (jnp.arange(F_, dtype=jnp.int32) * e_pad)[None, :]
        flat = jnp.take(tables_cat, (ids_nf + offs).reshape(-1), axis=0)
        return flat.reshape(N, F_, D).sum(axis=1).astype(out_dtype)

    # Row tile: as large as block_n allows, minimal padding, and at least
    # 2 grid steps so the "parallel" axis can feed both v7x TensorCores.
    n_steps = max(cdiv(N, block_n), 2)
    tn = max(rup(cdiv(N, n_steps), 8), 8)
    n_pad = rup(N, tn)
    if n_pad != N:
        # Padded rows look up id 0 -> garbage rows sliced off below.
        ids_nf = jnp.pad(ids_nf, ((0, n_pad - N), (0, 0)))

    # Explicit VMEM budget: single-buffered table + double-buffered ids/out
    # + the multi-hot temp, with generous slack.
    tab_item = tables_cat.dtype.itemsize
    est = (EF * D * tab_item                       # table (one buffer)
           + 2 * tn * F_ * 4                       # ids (double buffer)
           + 2 * tn * D * jnp.dtype(out_dtype).itemsize   # out (double buffer)
           + tn * EF * tab_item)                   # multi-hot temp
    vmem_limit = int(min(max(2 * est, 8 << 20), 100 << 20))

    out = pl.pallas_call(
        _cat_emb_kernel,
        out_shape=jax.ShapeDtypeStruct((n_pad, D), out_dtype),
        grid=(n_pad // tn,),
        in_specs=[
            pl.BlockSpec((tn, F_), lambda i: (i, 0)),        # ids, row-tiled
            # Whole concatenated table, constant index -> fetched once;
            # single buffer keeps VMEM headroom (v7x: 64 MiB).
            pl.BlockSpec((EF, D), lambda i: (0, 0),
                         pipeline_mode=pl.Buffered(1)),
        ],
        out_specs=pl.BlockSpec((tn, D), lambda i: (i, 0)),
        compiler_params=pltpu.CompilerParams(
            dimension_semantics=("parallel",),
            vmem_limit_bytes=vmem_limit),
    )(ids_nf, tables_cat)
    return out[:N]


if __name__ == "__main__":
    key = jax.random.PRNGKey(0)

    # Module config (small, consistent with the forward pass).
    emb_dim = 32
    num_emb_list = [5, 7, 11]            # F = 3 categorical features
    F_ = len(num_emb_list)
    N = 64                               # batch of N rows of categorical feats

    # Deterministic parameter init (nn.Embedding ~ N(0, 1)); pad every table to
    # a common E_pad (multiple of 8) with zero rows and concatenate.
    E_pad = max((max(num_emb_list) + 7) // 8 * 8, 8)      # -> 16
    k_tab, k_ids = jax.random.split(key)
    table_keys = jax.random.split(k_tab, F_)
    tables = []
    for i, num_emb in enumerate(num_emb_list):
        w = jax.random.normal(table_keys[i], (num_emb, emb_dim), dtype=jnp.float32)
        w = jnp.pad(w, ((0, E_pad - num_emb), (0, 0)))
        tables.append(w)
    tables = jnp.stack(tables, axis=0)                    # [F, E_pad, D]
    tables_cat = tables.reshape(F_ * E_pad, emb_dim)      # [F*E_pad, D]
    # (Production option: tables_cat = tables_cat.astype(jnp.bfloat16))

    # Input categorical_feats: [N, F] int32, column i in [0, num_emb_list[i]).
    id_keys = jax.random.split(k_ids, F_)
    cols = [jax.random.randint(id_keys[i], (N,), 0, num_emb_list[i], dtype=jnp.int32)
            for i in range(F_)]
    categorical_feats = jnp.stack(cols, axis=-1)          # [N, F] (PyTorch layout)

    # min_pallas_rows=0 forces the Pallas path in this small demo.
    out = categorical_embedding(categorical_feats, tables_cat, min_pallas_rows=0)
    out = jax.block_until_ready(out)                      # [N, D]

    # Reference (plain JAX) check of the PyTorch semantics.
    ref = jnp.zeros((N, emb_dim), jnp.float32)
    for i in range(F_):
        ref = ref + tables[i][categorical_feats[:, i]]
    assert out.shape == (N, emb_dim)
    assert jnp.allclose(out, ref, atol=1e-5, rtol=1e-5)

    print("KERNEL_OK")
</pallas_src>

<mosaic_0001>
module attributes {stable_mosaic.version = 11 : i64} {
  func.func @_cat_emb_kernel(%arg0: i32, %arg1: memref<32x3xi32, #tpu.memory_space<vmem>>, %arg2: memref<48x32xf32, #tpu.memory_space<vmem>>, %arg3: memref<32x32xf32, #tpu.memory_space<vmem>>) attributes {dimension_semantics = [#tpu.dimension_semantics<parallel>], iteration_bounds = array<i64: 2>, scalar_prefetch = 0 : i64, scratch_operands = 0 : i64, tpu.core_type = #tpu.core_type<tc>, window_params = [{transform_indices = @transform_0, window_bounds = array<i64: 32, 3>}, {pipeline_mode = #tpu.pipeline_mode<synchronous>, transform_indices = @transform_1, window_bounds = array<i64: 48, 32>}, {transform_indices = @transform_2, window_bounds = array<i64: 32, 32>}]} {
    %c0 = arith.constant 0 : index
    %c0_0 = arith.constant 0 : index
    %0 = vector.load %arg1[%c0, %c0_0] : memref<32x3xi32, #tpu.memory_space<vmem>>, vector<32x3xi32>
    %c0_1 = arith.constant 0 : index
    %c0_2 = arith.constant 0 : index
    %1 = vector.load %arg2[%c0_1, %c0_2] : memref<48x32xf32, #tpu.memory_space<vmem>>, vector<48x32xf32>
    %2 = tpu.iota {dimensions = array<i32: 1>} : vector<32x48xi32>
    %3 = vector.extract_strided_slice %0 {offsets = [0, 0], sizes = [32, 1], strides = [1, 1]} : vector<32x3xi32> to vector<32x1xi32>
    %4 = vector.broadcast %3 : vector<32x1xi32> to vector<32x48xi32>
    %5 = arith.cmpi eq, %4, %2 : vector<32x48xi32>
    %6 = vector.extract_strided_slice %0 {offsets = [0, 1], sizes = [32, 1], strides = [1, 1]} : vector<32x3xi32> to vector<32x1xi32>
    %c16_i32 = arith.constant 16 : i32
    %7 = vector.broadcast %c16_i32 : i32 to vector<32x1xi32>
    %8 = arith.addi %6, %7 : vector<32x1xi32>
    %9 = vector.broadcast %8 : vector<32x1xi32> to vector<32x48xi32>
    %10 = arith.cmpi eq, %9, %2 : vector<32x48xi32>
    %11 = arith.ori %5, %10 : vector<32x48xi1>
    %12 = vector.extract_strided_slice %0 {offsets = [0, 2], sizes = [32, 1], strides = [1, 1]} : vector<32x3xi32> to vector<32x1xi32>
    %c32_i32 = arith.constant 32 : i32
    %13 = vector.broadcast %c32_i32 : i32 to vector<32x1xi32>
    %14 = arith.addi %12, %13 : vector<32x1xi32>
    %15 = vector.broadcast %14 : vector<32x1xi32> to vector<32x48xi32>
    %16 = arith.cmpi eq, %15, %2 : vector<32x48xi32>
    %17 = arith.ori %11, %16 : vector<32x48xi1>
    %18 = arith.extui %17 : vector<32x48xi1> to vector<32x48xi32>
    %19 = arith.sitofp %18 : vector<32x48xi32> to vector<32x48xf32>
    %cst = arith.constant dense<0.000000e+00> : vector<32x32xf32>
    %20 = tpu.matmul %19, %1, %cst {dimension_numbers = #tpu.dot_dimension_numbers<[1], [0], [0], [1], [0, 0, 1, 1], [], []>} : vector<32x48xf32>, vector<48x32xf32>, vector<32x32xf32> -> vector<32x32xf32>
    %c0_3 = arith.constant 0 : index
    %c0_4 = arith.constant 0 : index
    %21 = vector.load %arg3[%c0_3, %c0_4] : memref<32x32xf32, #tpu.memory_space<vmem>>, vector<32x32xf32>
    tpu.vector_store %arg3[%c0_3, %c0_4], %20 {strides = array<i32>} : memref<32x32xf32, #tpu.memory_space<vmem>>, vector<32x32xf32>,
    return
  }
  func.func @transform_0(%arg0: i32) -> (i32, i32) {
    %c0_i32 = arith.constant 0 : i32
    %c0_i32_0 = arith.constant 0 : i32
    return %arg0, %c0_i32 : i32, i32
  }
  func.func @transform_1(%arg0: i32) -> (i32, i32) {
    %c0_i32 = arith.constant 0 : i32
    %c0_i32_0 = arith.constant 0 : i32
    %c0_i32_1 = arith.constant 0 : i32
    return %c0_i32, %c0_i32_0 : i32, i32
  }
  func.func @transform_2(%arg0: i32) -> (i32, i32) {
    %c0_i32 = arith.constant 0 : i32
    %c0_i32_0 = arith.constant 0 : i32
    return %arg0, %c0_i32 : i32, i32
  }
}

</mosaic_0001>

<llo_original>
// kernel: tpu_custom_call.1
$region0: #{tpu_custom_call.1}
  #allocation0 [shape = 'u32[]', space=smem, size = 0x4, offset = 0x4, fixed_abs, tag = 'smem constant byte address 0x4 - core index']
  #allocation1 [shape = 'u32[144,128]{1,0:T(1,128)}', space=vmem, size = 0x12000, scoped, tag = 'internal scratch']
  %s0 = inlined_call_operand.vmem [shape: s32[64,3], index: 0, kind: input, shape index: {}]
  %s1 = inlined_call_operand.vmem [shape: f32[48,32], index: 1, kind: input, shape index: {}]
  %s2 = inlined_call_operand.vmem [shape: f32[64,32], index: 2, kind: output, shape index: {}]
  %s3 = sld [smem:[#allocation0]]
  $region41: #{tpu_custom_call.1} parent=0
    _
  %s5 = ssub.s32 1, %s3
  %s6 = scalar_select 0, %s5, %s3
  loop: start=0, step=1, limit=4
  $region2: #{tpu_custom_call.1} parent=0 // loop_pre_header
    _
  $region3: #{tpu_custom_call.1} parent=0 // loop_header
    %s8 = sphi 0, %s12
    %p9 = scmp.ge.s32.totalorder %s8, 4
    %s18 = sphi 0, %s20
    %s21 = sphi 0, %s18
    %s22 = sphi 0, %s21
    %s38 = sphi 0, %s22
    %s42 = sphi 0, %s42
    %s44 = sphi 0, %s42
    %s45 = sphi 0, %s44
    %s59 = sphi 0, %s45
    %s65 = sphi 0, %s67
    %s68 = sphi 0, %s65
    %s69 = sphi 0, %s68
    %s85 = sphi 0, %s69
  $region4: #{tpu_custom_call.1} parent=0 // loop_header_branch
    %11 = sbr.rel (%p9) target = $region8
  $region5: #{tpu_custom_call.1} parent=0 // loop_body
    %s13 = ssub.s32 %s8, 1
    %s14 = ssub.s32 %s8, 2
    %s15 = sadd.s32 %s8, 1
    %s16 = ssub.s32 %s8, %s15
    %p17 = scmp.eq.s32.totalorder %s16, 0
    %s19 = sadd.s32 %s18, 1
    %s20 = scalar_select %p17, %s18, %s19
    %p23 = pneg %p17
    %p24 = scmp.eq.s32.totalorder %s8, 1
    %p25 = por %p23, %p24
    %p26 = scmp.ne.s32.totalorder %s18, %s21
    %p27 = scmp.eq.s32.totalorder %s8, 0
    %p28 = por %p26, %p27
    %p29 = scmp.ne.s32.totalorder %s18, %s21
    %p30 = scmp.eq.s32.totalorder %s13, 1
    %p31 = por %p29, %p30
    %p32 = scmp.ne.s32.totalorder %s21, %s22
    %p33 = scmp.eq.s32.totalorder %s13, 0
    %p34 = por %p32, %p33
    %p35 = scmp.ne.s32.totalorder %s21, %s22
    %p36 = scmp.eq.s32.totalorder %s14, 1
    %p37 = por %p35, %p36
    %p39 = scmp.ne.s32.totalorder %s22, %s38
    %p40 = scmp.eq.s32.totalorder %s14, 0
    %p41 = por %p39, %p40
    %s43 = sadd.s32 %s42, 1
    %p46 = scmp.eq.s32.totalorder %s8, 1
    %p47 = scmp.ne.s32.totalorder %s42, %s44
    %p48 = scmp.eq.s32.totalorder %s8, 0
    %p49 = por %p47, %p48
    %p50 = scmp.ne.s32.totalorder %s42, %s44
    %p51 = scmp.eq.s32.totalorder %s13, 1
    %p52 = por %p50, %p51
    %p53 = scmp.ne.s32.totalorder %s44, %s45
    %p54 = scmp.eq.s32.totalorder %s13, 0
    %p55 = por %p53, %p54
    %p56 = scmp.ne.s32.totalorder %s44, %s45
    %p57 = scmp.eq.s32.totalorder %s14, 1
    %p58 = por %p56, %p57
    %p60 = scmp.ne.s32.totalorder %s45, %s59
    %p61 = scmp.eq.s32.totalorder %s14, 0
    %p62 = por %p60, %p61
    %s63 = ssub.s32 %s8, %s15
    %p64 = scmp.eq.s32.totalorder %s63, 0
    %s66 = sadd.s32 %s65, 1
    %s67 = scalar_select %p64, %s65, %s66
    %p70 = pneg %p64
    %p71 = scmp.eq.s32.totalorder %s8, 1
    %p72 = por %p70, %p71
    %p73 = scmp.ne.s32.totalorder %s65, %s68
    %p74 = scmp.eq.s32.totalorder %s8, 0
    %p75 = por %p73, %p74
    %p76 = scmp.ne.s32.totalorder %s65, %s68
    %p77 = scmp.eq.s32.totalorder %s13, 1
    %p78 = por %p76, %p77
    %p79 = scmp.ne.s32.totalorder %s68, %s69
    %p80 = scmp.eq.s32.totalorder %s13, 0
    %p81 = por %p79, %p80
    %p82 = scmp.ne.s32.totalorder %s68, %s69
    %p83 = scmp.eq.s32.totalorder %s14, 1
    %p84 = por %p82, %p83
    %p86 = scmp.ne.s32.totalorder %s69, %s85
    %p87 = scmp.eq.s32.totalorder %s14, 0
    %p88 = por %p86, %p87
    %p89 = scmp.le.s32.totalorder 1, %s8
    %p90 = scmp.lt.s32.totalorder %s8, 3
    %p91 = pnand %p89, %p90
    %p92 = pneg %p91
    // Predicated region
    $region9: #{tpu_custom_call.1} parent=5 // pred_check
      _
    $region10: #{tpu_custom_call.1} parent=5 // pred_check_branch
      %94 = sbr.rel (%p91) target = $region12
    $region11: #{tpu_custom_call.1} parent=5 // pred_region
      %s95 = ssub.s32 %s8, 1
      // Predicated region
      $region13: #{tpu_custom_call.1} parent=11 // pred_check
        %p96 = pneg %p55
      $region14: #{tpu_custom_call.1} parent=11 // pred_check_branch
        %98 = sbr.rel (%p96) target = $region16
      $region15: #{tpu_custom_call.1} parent=11 // pred_region
        _
      $region16: #{tpu_custom_call.1} parent=11 // pred_fallthru
        _
    $region12: #{tpu_custom_call.1} parent=5 // pred_fallthru
      _
    %p99 = scmp.lt.s32.totalorder %s8, 2
    // Predicated region
    $region17: #{tpu_custom_call.1} parent=5 // pred_check
      %p100 = pneg %p99
    $region18: #{tpu_custom_call.1} parent=5 // pred_check_branch
      %102 = sbr.rel (%p100) target = $region20
    $region19: #{tpu_custom_call.1} parent=5 // pred_region
      // Predicated region
      $region21: #{tpu_custom_call.1} parent=19 // pred_check
        %p103 = pneg %p28
      $region22: #{tpu_custom_call.1} parent=19 // pred_check_branch
        %105 = sbr.rel (%p103) target = $region24
      $region23: #{tpu_custom_call.1} parent=19 // pred_region
        %s106 = smul.u32 4, %s8
        %p107 = scmp.lt.s32.totalorder %s106, 7
        %s108 = scalar_select %p107, %s106, 7
        %s109 = smul.addr %s108, 8
        %s110 = scalar_lea.vmem %s0, %s109
        %s111 = smul.u32 4, %s8
      $region24: #{tpu_custom_call.1} parent=19 // pred_fallthru
        _
    $region20: #{tpu_custom_call.1} parent=5 // pred_fallthru
      _
    %p112 = scmp.le.s32.totalorder 1, %s8
    %p113 = scmp.lt.s32.totalorder %s8, 3
    %p114 = pnand %p112, %p113
    %p115 = pneg %p114
    // Predicated region
    $region25: #{tpu_custom_call.1} parent=5 // pred_check
      _
    $region26: #{tpu_custom_call.1} parent=5 // pred_check_branch
      %117 = sbr.rel (%p114) target = $region28
    $region27: #{tpu_custom_call.1} parent=5 // pred_region
      %s118 = ssub.s32 %s8, 1
      %s119 = smul.u32 4, %s13
      %p120 = scmp.lt.s32.totalorder %s119, 7
      %s121 = scalar_select %p120, %s119, 7
      %s122 = smul.addr %s121, 8
      %s123 = scalar_lea.vmem %s0, %s122
      %p124 = pneg %p34
      %p125 = pneg %p31
      %p126 = pneg %p55
      %p127 = pneg %p52
      %p128 = pneg %p81
      %p129 = pneg %p78
      %s130 = smul.u32 4, %s13
      %p131 = scmp.lt.s32.totalorder %s130, 7
      %s132 = scalar_select %p131, %s130, 7
      %s133 = smul.addr %s132, 8
      %s134 = scalar_lea.vmem %s2, %s133
      %s135 = smul.u32 4, %s13
      %p136 = scmp.lt.s32.totalorder %s135, 7
      %s137 = scalar_select %p136, %s135, 7
      %s138 = smul.addr %s137, 8
      %s139 = scalar_lea.vmem %s0, %s138
      %s140 = smul.u32 4, %s13
      %s141 = smul.u32 4, %s13
      %p142 = scmp.lt.s32.totalorder %s141, 7
      %s143 = scalar_select %p142, %s141, 7
      %s144 = smul.addr %s143, 8
      %s145 = scalar_lea.vmem %s2, %s144
      %s146 = smul.u32 4, %s13
      %v147 = vld [vmem:[%s139] sm:$0xff]
      %v148 = vld [vmem:[%s139 + $0x8] sm:$0xff]
      %v149 = vld [vmem:[%s139 + $0x10] sm:$0xff]
      %v150 = vld [vmem:[%s139 + $0x18] sm:$0xff]
      %v151 = vld [vmem:[%s1] sm:$0xff]
      %v152 = vld [vmem:[%s1 + $0x8] sm:$0xff]
      %v153 = vld [vmem:[%s1 + $0x10] sm:$0xff]
      %v154 = vld [vmem:[%s1 + $0x18] sm:$0xff]
      %v155 = vld [vmem:[%s1 + $0x20] sm:$0xff]
      %v156 = vld [vmem:[%s1 + $0x28] sm:$0xff]
      %v157 = vlaneseq
      %v158 = vand.u32 %v157, 127
      %159 = vset.pattern.permute.xlu0 0
      %160 = vperm.xlu0 %159, %v147
      %v161 = vpop.permute.xlu0 %160
      %162 = vset.pattern.permute.xlu0 0
      %163 = vperm.xlu0 %162, %v148
      %v164 = vpop.permute.xlu0 %163
      %165 = vset.pattern.permute.xlu0 0
      %166 = vperm.xlu0 %165, %v149
      %v167 = vpop.permute.xlu0 %166
      %168 = vset.pattern.permute.xlu0 0
      %169 = vperm.xlu0 %168, %v150
      %v170 = vpop.permute.xlu0 %169
      %vm171 = vcmp.eq.s32.totalorder %v161, %v158
      %vm172 = vcmp.eq.s32.totalorder %v164, %v158
      %vm173 = vcmp.eq.s32.totalorder %v167, %v158
      %vm174 = vcmp.eq.s32.totalorder %v170, %v158
      %v175 = vadd.s32 %v147, 16
      %v176 = vadd.s32 %v148, 16
      %v177 = vadd.s32 %v149, 16
      %v178 = vadd.s32 %v150, 16
      %179 = vset.pattern.permute.xlu0 1
      %180 = vperm.xlu0 %179, %v175
      %v181 = vpop.permute.xlu0 %180
      %182 = vset.pattern.permute.xlu0 1
      %183 = vperm.xlu0 %182, %v176
      %v184 = vpop.permute.xlu0 %183
      %185 = vset.pattern.permute.xlu0 1
      %186 = vperm.xlu0 %185, %v177
      %v187 = vpop.permute.xlu0 %186
      %188 = vset.pattern.permute.xlu0 1
      %189 = vperm.xlu0 %188, %v178
      %v190 = vpop.permute.xlu0 %189
      %vm191 = vcmp.eq.s32.totalorder %v181, %v158
      %vm192 = vcmp.eq.s32.totalorder %v184, %v158
      %vm193 = vcmp.eq.s32.totalorder %v187, %v158
      %vm194 = vcmp.eq.s32.totalorder %v190, %v158
      %vm195 = vmor %vm171, %vm191
      %vm196 = vmor %vm172, %vm192
      %vm197 = vmor %vm173, %vm193
      %vm198 = vmor %vm174, %vm194
      %v199 = vadd.s32 %v147, 32
      %v200 = vadd.s32 %v148, 32
      %v201 = vadd.s32 %v149, 32
      %v202 = vadd.s32 %v150, 32
      %203 = vset.pattern.permute.xlu0 2
      %204 = vperm.xlu0 %203, %v199
      %v205 = vpop.permute.xlu0 %204
      %206 = vset.pattern.permute.xlu0 2
      %207 = vperm.xlu0 %206, %v200
      %v208 = vpop.permute.xlu0 %207
      %209 = vset.pattern.permute.xlu0 2
      %210 = vperm.xlu0 %209, %v201
      %v211 = vpop.permute.xlu0 %210
      %212 = vset.pattern.permute.xlu0 2
      %213 = vperm.xlu0 %212, %v202
      %v214 = vpop.permute.xlu0 %213
      %vm215 = vcmp.eq.s32.totalorder %v205, %v158
      %vm216 = vcmp.eq.s32.totalorder %v208, %v158
      %vm217 = vcmp.eq.s32.totalorder %v211, %v158
      %vm218 = vcmp.eq.s32.totalorder %v214, %v158
      %vm219 = vmor %vm195, %vm215
      %vm220 = vmor %vm196, %vm216
      %vm221 = vmor %vm197, %vm217
      %vm222 = vmor %vm198, %vm218
      %v223 = vsel %vm219, 1, 0
      %v224 = vsel %vm220, 1, 0
      %v225 = vsel %vm221, 1, 0
      %v226 = vsel %vm222, 1, 0
      %v227 = vcvt.s32.f32 %v223
      %v228 = vcvt.s32.f32 %v224
      %v229 = vcvt.s32.f32 %v225
      %v230 = vcvt.s32.f32 %v226
      %vm231 = vcmask 392192
      %v233 = vsel %vm231, %v227, 0
      %v236 = vsel %vm231, %v228, 0
      %v239 = vsel %vm231, %v229, 0
      %v242 = vsel %vm231, %v230, 0
      %244 = vmatprep.subr.mxu0 0.0
      %245 = vmatpush1.msra.mxu0 %v151
      %246 = vmatprep.subr.mxu0 0.0
      %247 = vmatpush1.msra.mxu0 %v152
      %248 = vmatprep.subr.mxu0 0.0
      %249 = vmatpush1.msra.mxu0 %v153
      %250 = vmatprep.subr.mxu0 0.0
      %251 = vmatpush1.msra.mxu0 %v154
      %252 = vmatprep.subr.mxu0 0.0
      %253 = vmatpush1.msra.mxu0 %v155
      %254 = vmatprep.subr.mxu0 0.0
      %255 = vmatpush1.msra.mxu0 %v156
      %256 = vmatprep.subr.mxu0 0.0
      %257 = vmatpush1.msra.mxu0 0.0
      %258 = vmatprep.subr.mxu0 0.0
      %259 = vmatpush1.msra.mxu0 0.0
      %260 = vmatprep.subr.mxu0 0.0
      %261 = vmatpush1.msra.mxu0 0.0
      %262 = vmatprep.subr.mxu0 0.0
      %263 = vmatpush1.msra.mxu0 0.0
      %264 = vmatprep.subr.mxu0 0.0
      %265 = vmatpush1.msra.mxu0 0.0
      %266 = vmatprep.subr.mxu0 0.0
      %267 = vmatpush1.msra.mxu0 0.0
      %268 = vmatprep.subr.mxu0 0.0
      %269 = vmatpush1.msra.mxu0 0.0
      %270 = vmatprep.subr.mxu0 0.0
      %271 = vmatpush1.msra.mxu0 0.0
      %272 = vmatprep.subr.mxu0 0.0
      %273 = vmatpush1.msra.mxu0 0.0
      %274 = vmatprep.subr.mxu0 0.0
      %275 = vmatpush1.msra.mxu0 0.0
      %276 = vmatprep.subr.mxu0 0.0
      %277 = vmatpush1.msra.mxu0 0.0
      %278 = vmatprep.subr.mxu0 0.0
      %279 = vmatpush1.msra.mxu0 0.0
      %280 = vmatprep.subr.mxu0 0.0
      %281 = vmatpush1.msra.mxu0 0.0
      %282 = vmatprep.subr.mxu0 0.0
      %283 = vmatpush1.msra.mxu0 0.0
      %284 = vmatprep.subr.mxu0 0.0
      %285 = vmatpush1.msra.mxu0 0.0
      %286 = vmatprep.subr.mxu0 0.0
      %287 = vmatpush1.msra.mxu0 0.0
      %288 = vmatprep.subr.mxu0 0.0
      %289 = vmatpush1.msra.mxu0 0.0
      %290 = vmatprep.subr.mxu0 0.0
      %291 = vmatpush1.msra.mxu0 0.0
      %292 = vmatprep.subr.mxu0 0.0
      %293 = vmatpush1.msra.mxu0 0.0
      %294 = vmatprep.subr.mxu0 0.0
      %295 = vmatpush1.msra.mxu0 0.0
      %296 = vmatprep.subr.mxu0 0.0
      %297 = vmatpush1.msra.mxu0 0.0
      %298 = vmatprep.subr.mxu0 0.0
      %299 = vmatpush1.msra.mxu0 0.0
      %300 = vmatprep.subr.mxu0 0.0
      %301 = vmatpush1.msra.mxu0 0.0
      %302 = vmatprep.subr.mxu0 0.0
      %303 = vmatpush1.msra.mxu0 0.0
      %304 = vmatprep.subr.mxu0 0.0
      %305 = vmatpush1.msra.mxu0 0.0
      %306 = vmatprep.subr.mxu0 0.0
      %307 = vmatpush1.msra.mxu0 0.0
      %308 = vmatprep.mubr.f32.mxu0 0.0
      %309 = vmatmul.mubr.f32.gmra.mrb[0].mxu0 %v233
      %v310 = vpop.f32.mrb[0].mxu0
      %v311 = vadd.f32 0.0, %v310
      %v312 = vpop.f32.mrb[0].mxu0
      %313 = vmatprep.mubr.f32.mxu0 0.0
      %314 = vmatmul.mubr.f32.gmra.mrb[0].mxu0 %v236
      %v315 = vpop.f32.mrb[0].mxu0
      %v316 = vadd.f32 0.0, %v315
      %v317 = vpop.f32.mrb[0].mxu0
      %318 = vmatprep.mubr.f32.mxu0 0.0
      %319 = vmatmul.mubr.f32.gmra.mrb[0].mxu0 %v239
      %v320 = vpop.f32.mrb[0].mxu0
      %v321 = vadd.f32 0.0, %v320
      %v322 = vpop.f32.mrb[0].mxu0
      %323 = vmatprep.mubr.f32.mxu0 0.0
      %324 = vmatmul.mubr.f32.gmra.mrb[0].mxu0 %v242
      %v325 = vpop.f32.mrb[0].mxu0
      %v326 = vadd.f32 0.0, %v325
      %v327 = vpop.f32.mrb[0].mxu0
      %328 = vdwg.mxu0
      %vm329 = vcmask 261120
      %330 = vst.msk [vmem:[%s145] sm:$0xff] %vm329, %v311
      %331 = vst.msk [vmem:[%s145 + $0x8] sm:$0xff] %vm329, %v316
      %332 = vst.msk [vmem:[%s145 + $0x10] sm:$0xff] %vm329, %v321
      %333 = vst.msk [vmem:[%s145 + $0x18] sm:$0xff] %vm329, %v326
      %s334 = smul.u32 4, %s13
      %p335 = scmp.lt.s32.totalorder %s334, 7
      %s336 = scalar_select %p335, %s334, 7
      %s337 = smul.addr %s336, 8
      %s338 = scalar_lea.vmem %s2, %s337
      // Predicated region
      $region29: #{tpu_custom_call.1} parent=27 // pred_check
        %p339 = pneg %p78
      $region30: #{tpu_custom_call.1} parent=27 // pred_check_branch
        %341 = sbr.rel (%p339) target = $region32
      $region31: #{tpu_custom_call.1} parent=27 // pred_region
        %s342 = smul.u32 4, %s13
      $region32: #{tpu_custom_call.1} parent=27 // pred_fallthru
        _
    $region28: #{tpu_custom_call.1} parent=5 // pred_fallthru
      _
    %p343 = scmp.le.s32.totalorder 2, %s8
    // Predicated region
    $region33: #{tpu_custom_call.1} parent=5 // pred_check
      %p344 = pneg %p343
    $region34: #{tpu_custom_call.1} parent=5 // pred_check_branch
      %346 = sbr.rel (%p344) target = $region36
    $region35: #{tpu_custom_call.1} parent=5 // pred_region
      %s347 = ssub.s32 %s8, 2
      // Predicated region
      $region37: #{tpu_custom_call.1} parent=35 // pred_check
        %p348 = pneg %p84
      $region38: #{tpu_custom_call.1} parent=35 // pred_check_branch
        %350 = sbr.rel (%p348) target = $region40
      $region39: #{tpu_custom_call.1} parent=35 // pred_region
        %s351 = smul.u32 4, %s14
        %p352 = scmp.lt.s32.totalorder %s351, 7
        %s353 = scalar_select %p352, %s351, 7
        %s354 = smul.addr %s353, 8
        %s355 = scalar_lea.vmem %s2, %s354
      $region40: #{tpu_custom_call.1} parent=35 // pred_fallthru
        _
    $region36: #{tpu_custom_call.1} parent=5 // pred_fallthru
      _
  $region6: #{tpu_custom_call.1} parent=0 // loop_footer
    %s12 = sadd.s32 1, %s8
  $region7: #{tpu_custom_call.1} parent=0 // loop_footer_branch
    %7 = sbr.rel target = $region3
  $region8: #{tpu_custom_call.1} parent=0 // loop_exit
    _

</llo_original>
